<compile_context>
chip_gen: v7x
topology: tpu7x:2x2x1
jax: 0.10.0
libtpu: 0.0.40
codegen_flags: <defaults>
</compile_context>

<pallas_src>
import jax
import jax.numpy as jnp
import numpy as np
from jax.experimental import pallas as pl
from jax.experimental.pallas import tpu as pltpu

BN_EPS = 1e-3          # nn.BatchNorm1d(hidden_dim, eps=0.001)
MASK_THRESHOLD = 0.5   # threshold_fn='binarizer', threshold=0.5
LANE = 128
SUBLANE = 8


# ---------------------------------------------------------------------------
# helpers
# ---------------------------------------------------------------------------
def _round_up(x, m):
    return (x + m - 1) // m * m


def _pad2(x, rows, cols):
    return jnp.pad(x, ((0, rows - x.shape[0]), (0, cols - x.shape[1])))


def _fold_and_pad(params, input_dim):
    """Fold eval-mode BN + GraphConv bias into (W', b'), precompute the masked
    prediction weight, and zero-pad all feature dims to a multiple of 128."""
    num_gcn = len(params["gcn_w"])
    hidden_dim = params["gcn_w"][0].shape[1]
    output_dim = params["pred_w"].shape[1]
    f_pad = _round_up(max(input_dim, hidden_dim), LANE)
    out_pad = _round_up(output_dim, LANE)

    w_list, b_list = [], []
    for i in range(num_gcn):
        s = params["bn_gamma"][i] * jax.lax.rsqrt(params["bn_var"][i] + BN_EPS)   # (1, hid)
        w_fold = params["gcn_w"][i] * s                                           # (fin, hid)
        b_fold = (params["gcn_b"][i] - params["bn_mean"][i]) * s + params["bn_beta"][i]
        w_list.append(_pad2(w_fold, f_pad, f_pad))
        b_list.append(_pad2(b_fold, 1, f_pad))
    w_stack = jnp.stack(w_list).astype(jnp.bfloat16)    # (L, f_pad, f_pad)  bf16 MXU operand
    b_stack = jnp.stack(b_list)                         # (L, 1, f_pad)      f32 epilogue

    w_eff = params["pred_w"] * (params["mask_real"] > MASK_THRESHOLD).astype(jnp.float32)
    w_eff = _pad2(w_eff, f_pad, out_pad).astype(jnp.bfloat16)
    b_pred = _pad2(params["pred_b"], 1, out_pad)
    return w_stack, b_stack, w_eff, b_pred, f_pad, out_pad


# ---------------------------------------------------------------------------
# fused Pallas kernel: per-graph GCN stack + sum-pooling + masked linear
# ---------------------------------------------------------------------------
def make_fused_kernel(num_gcn):
    def kernel(a_ref, h0_ref, w_ref, b_ref, weff_ref, bpred_ref, o_ref):
        a = a_ref[0]                  # (npg, npg)     bf16 normalized adjacency block
        h = h0_ref[...]               # (npg, f_pad)   f32 node features of this graph
        for i in range(num_gcn):      # unrolled at trace time
            # (A @ H) @ W'; feature dims are padded to 128 so association choice is moot.
            ah = jnp.dot(a, h.astype(jnp.bfloat16), preferred_element_type=jnp.float32)
            z = jnp.dot(ah.astype(jnp.bfloat16), w_ref[i],
                        preferred_element_type=jnp.float32) + b_ref[i]
            hn = jnp.maximum(z, 0.0)            # relu; BN already folded into W'/b'
            h = hn if i == 0 else hn + h        # residual skipped for layer 0 (no zero DMA)
        # SumPooling over this graph's nodes, then MaskLinear (mask pre-applied).
        pooled = jnp.sum(h, axis=0, keepdims=True)                        # (1, f_pad) f32
        out = jnp.dot(pooled.astype(jnp.bfloat16), weff_ref[...],
                      preferred_element_type=jnp.float32) + bpred_ref[...]
        o_ref[...] = out[None]                                            # (1, 1, out_pad)
    return kernel


@jax.jit
def mask_gcn_forward(a_blocks, h0, params):
    """a_blocks: (G, npg, npg) per-graph normalized adjacency (block-diagonal overall).
       h0:       (G*npg, input_dim) node features, graphs concatenated in order."""
    num_graphs, npg, _ = a_blocks.shape
    n_nodes, input_dim = h0.shape
    num_gcn = len(params["gcn_w"])
    output_dim = params["pred_w"].shape[1]
    assert n_nodes == num_graphs * npg
    assert npg % SUBLANE == 0, "per-graph node count must be a multiple of 8"
    # TODO(synk): ragged / unequal graph sizes need PrefetchScalarGridSpec with per-graph
    # node offsets plus a node-validity mask before the pooling sum.

    w_stack, b_stack, w_eff, b_pred, f_pad, out_pad = _fold_and_pad(params, input_dim)
    h0_pad = _pad2(h0, n_nodes, f_pad)                 # f32; padded feature cols stay zero
    a_bf16 = a_blocks.astype(jnp.bfloat16)             # halves HBM bytes of the O(N^2) array

    out = pl.pallas_call(
        make_fused_kernel(num_gcn),
        out_shape=jax.ShapeDtypeStruct((num_graphs, 1, out_pad), jnp.float32),
        grid_spec=pltpu.PrefetchScalarGridSpec(
            num_scalar_prefetch=0,
            grid=(num_graphs,),
            in_specs=[
                pl.BlockSpec((1, npg, npg), lambda g: (g, 0, 0)),            # A_gg block
                pl.BlockSpec((npg, f_pad), lambda g: (g, 0)),                # h0 rows of graph g
                pl.BlockSpec((num_gcn, f_pad, f_pad), lambda g: (0, 0, 0)),  # folded W' stack
                pl.BlockSpec((num_gcn, 1, f_pad), lambda g: (0, 0, 0)),      # folded b' stack
                pl.BlockSpec((f_pad, out_pad), lambda g: (0, 0)),            # masked pred weight
                pl.BlockSpec((1, out_pad), lambda g: (0, 0)),                # pred bias
            ],
            out_specs=pl.BlockSpec((1, 1, out_pad), lambda g: (g, 0, 0)),
        ),
        compiler_params=pltpu.CompilerParams(
            dimension_semantics=("parallel",),    # shard graphs across TCs on v7x
        ),
    )(a_bf16, h0_pad, w_stack, b_stack, w_eff, b_pred)
    # TODO(synk): dropout (training=True path) not implemented; eval path only.
    return out[:, 0, :output_dim]


# ---------------------------------------------------------------------------
# references
# ---------------------------------------------------------------------------
def matched_reference(a_blocks, h0, params):
    """Pure-JAX mirror of the kernel's exact numerics (folded BN, bf16 matmul operands)."""
    num_graphs, npg, _ = a_blocks.shape
    n_nodes, input_dim = h0.shape
    num_gcn = len(params["gcn_w"])
    output_dim = params["pred_w"].shape[1]
    w_stack, b_stack, w_eff, b_pred, f_pad, _ = _fold_and_pad(params, input_dim)
    h0_pad = _pad2(h0, n_nodes, f_pad).reshape(num_graphs, npg, f_pad)
    a = a_blocks.astype(jnp.bfloat16)
    outs = []
    for g in range(num_graphs):
        h = h0_pad[g]
        for i in range(num_gcn):
            ah = jnp.dot(a[g], h.astype(jnp.bfloat16), preferred_element_type=jnp.float32)
            z = jnp.dot(ah.astype(jnp.bfloat16), w_stack[i],
                        preferred_element_type=jnp.float32) + b_stack[i]
            hn = jnp.maximum(z, 0.0)
            h = hn if i == 0 else hn + h
        pooled = jnp.sum(h, axis=0, keepdims=True)
        out = jnp.dot(pooled.astype(jnp.bfloat16), w_eff,
                      preferred_element_type=jnp.float32) + b_pred
        outs.append(out)
    return jnp.concatenate(outs, axis=0)[:, :output_dim]


def reference_forward_f32(a_full, pool_mat, h0, params):
    """Direct f32 translation of the PyTorch module (eval mode, unfolded math)."""
    num_gcn = len(params["gcn_w"])
    h = h0
    for i in range(num_gcn):
        x = h
        z = a_full @ h @ params["gcn_w"][i] + params["gcn_b"][i]
        bn = (z - params["bn_mean"][i]) / jnp.sqrt(params["bn_var"][i] + BN_EPS) \
             * params["bn_gamma"][i] + params["bn_beta"][i]
        h = jnp.maximum(bn, 0.0) + (x if i != 0 else 0.0)
    pooled = pool_mat @ h
    w_eff = params["pred_w"] * (params["mask_real"] > MASK_THRESHOLD).astype(jnp.float32)
    return pooled @ w_eff + params["pred_b"]


# ---------------------------------------------------------------------------
# main
# ---------------------------------------------------------------------------
if __name__ == "__main__":
    key = jax.random.PRNGKey(0)

    # Model config (MaskGCN(num_layers, input_dim, hidden_dim, output_dim))
    num_layers = 3            # -> 2 GraphConv layers
    input_dim = 16
    hidden_dim = 32
    output_dim = 8

    # Graph config: 4 equal-sized graphs of 16 nodes each
    num_graphs = 4
    nodes_per_graph = 16
    n_nodes = num_graphs * nodes_per_graph

    keys = jax.random.split(key, 16)

    # per-graph symmetric adjacency, normalized D^-1/2 A D^-1/2 (allow_zero_in_degree)
    raw = jax.random.bernoulli(keys[0], 0.4,
                               (num_graphs, nodes_per_graph, nodes_per_graph)).astype(jnp.float32)
    adj = jnp.maximum(raw, jnp.swapaxes(raw, 1, 2))
    deg = jnp.maximum(adj.sum(axis=2), 1.0)
    dinv = 1.0 / jnp.sqrt(deg)
    a_blocks = adj * dinv[:, :, None] * dinv[:, None, :]                 # (G, npg, npg)

    # full block-diagonal adjacency + sum-pooling matrix (for the f32 reference)
    a_full = jnp.zeros((n_nodes, n_nodes), jnp.float32)
    for g in range(num_graphs):
        a_full = a_full.at[g * nodes_per_graph:(g + 1) * nodes_per_graph,
                           g * nodes_per_graph:(g + 1) * nodes_per_graph].set(a_blocks[g])
    graph_id = jnp.repeat(jnp.arange(num_graphs), nodes_per_graph)
    pool_mat = (graph_id[None, :] == jnp.arange(num_graphs)[:, None]).astype(jnp.float32)

    # node features
    h0 = jax.random.normal(keys[1], (n_nodes, input_dim), jnp.float32)

    # deterministic parameters
    dims = [input_dim] + [hidden_dim] * (num_layers - 1)
    gcn_w, gcn_b, bn_gamma, bn_beta, bn_mean, bn_var = [], [], [], [], [], []
    for i in range(num_layers - 1):
        kw, kb, kg, kbe, km, kv = jax.random.split(keys[2 + i], 6)
        fin, fout = dims[i], dims[i + 1]
        gcn_w.append(jax.random.normal(kw, (fin, fout), jnp.float32) * 0.1)
        gcn_b.append(jax.random.normal(kb, (1, fout), jnp.float32) * 0.1)
        bn_gamma.append(1.0 + 0.1 * jax.random.normal(kg, (1, fout), jnp.float32))
        bn_beta.append(0.1 * jax.random.normal(kbe, (1, fout), jnp.float32))
        bn_mean.append(0.1 * jax.random.normal(km, (1, fout), jnp.float32))
        bn_var.append(1.0 + 0.1 * jax.random.uniform(kv, (1, fout), jnp.float32))

    # MaskLinear parameters (mask_real uniform in [0,1] so the binarizer is non-trivial)
    pred_w = jax.random.normal(keys[10], (hidden_dim, output_dim), jnp.float32) * 0.1
    pred_b = jax.random.normal(keys[11], (1, output_dim), jnp.float32) * 0.1
    mask_real = jax.random.uniform(keys[12], (hidden_dim, output_dim), jnp.float32)

    params = {
        "gcn_w": gcn_w, "gcn_b": gcn_b,
        "bn_gamma": bn_gamma, "bn_beta": bn_beta,
        "bn_mean": bn_mean, "bn_var": bn_var,
        "pred_w": pred_w, "pred_b": pred_b, "mask_real": mask_real,
    }

    out = mask_gcn_forward(a_blocks, h0, params)
    out = jax.block_until_ready(out)

    # 1) strict check against a pure-JAX mirror of the kernel's numerics
    ref_m = matched_reference(a_blocks, h0, params)
    np.testing.assert_allclose(np.asarray(out), np.asarray(ref_m), rtol=1e-4, atol=1e-4)

    # 2) sanity check against the full-precision f32 reference (bf16 MXU operands
    #    introduce ~1% error, so compare in norm with a loose bound)
    ref_f = reference_forward_f32(a_full, pool_mat, h0, params)
    rel_err = float(np.linalg.norm(np.asarray(out) - np.asarray(ref_f))
                    / np.linalg.norm(np.asarray(ref_f)))
    assert rel_err < 5e-2, f"bf16 kernel vs f32 reference rel error too large: {rel_err}"

    print("KERNEL_OK")
</pallas_src>

<mosaic_0001>
module attributes {stable_mosaic.version = 11 : i64} {
  func.func @kernel(%arg0: i32, %arg1: memref<1x16x16xbf16, #tpu.memory_space<vmem>>, %arg2: memref<16x128xf32, #tpu.memory_space<vmem>>, %arg3: memref<2x128x128xbf16, #tpu.memory_space<vmem>>, %arg4: memref<2x1x128xf32, #tpu.memory_space<vmem>>, %arg5: memref<128x128xbf16, #tpu.memory_space<vmem>>, %arg6: memref<1x128xf32, #tpu.memory_space<vmem>>, %arg7: memref<1x1x128xf32, #tpu.memory_space<vmem>>) attributes {dimension_semantics = [#tpu.dimension_semantics<parallel>], iteration_bounds = array<i64: 4>, scalar_prefetch = 0 : i64, scratch_operands = 0 : i64, tpu.core_type = #tpu.core_type<tc>, window_params = [{transform_indices = @transform_0, window_bounds = array<i64: 1, 16, 16>}, {transform_indices = @transform_1, window_bounds = array<i64: 16, 128>}, {pipeline_mode = #tpu.pipeline_mode<synchronous>, transform_indices = @transform_2, window_bounds = array<i64: 2, 128, 128>}, {pipeline_mode = #tpu.pipeline_mode<synchronous>, transform_indices = @transform_3, window_bounds = array<i64: 2, 1, 128>}, {pipeline_mode = #tpu.pipeline_mode<synchronous>, transform_indices = @transform_4, window_bounds = array<i64: 128, 128>}, {pipeline_mode = #tpu.pipeline_mode<synchronous>, transform_indices = @transform_5, window_bounds = array<i64: 1, 128>}, {transform_indices = @transform_6, window_bounds = array<i64: 1, 1, 128>}]} {
    %c0 = arith.constant 0 : index
    %c0_0 = arith.constant 0 : index
    %c0_1 = arith.constant 0 : index
    %0 = vector.load %arg1[%c0, %c0_0, %c0_1] : memref<1x16x16xbf16, #tpu.memory_space<vmem>>, vector<1x16x16xbf16>
    %1 = vector.shape_cast %0 : vector<1x16x16xbf16> to vector<16x16xbf16>
    %c0_2 = arith.constant 0 : index
    %c0_3 = arith.constant 0 : index
    %2 = vector.load %arg2[%c0_2, %c0_3] : memref<16x128xf32, #tpu.memory_space<vmem>>, vector<16x128xf32>
    %3 = arith.truncf %2 : vector<16x128xf32> to vector<16x128xbf16>
    %cst = arith.constant dense<0.000000e+00> : vector<16x128xf32>
    %4 = tpu.matmul %1, %3, %cst {dimension_numbers = #tpu.dot_dimension_numbers<[1], [0], [0], [1], [0, 0, 1, 1], [], []>} : vector<16x16xbf16>, vector<16x128xbf16>, vector<16x128xf32> -> vector<16x128xf32>
    %5 = arith.truncf %4 : vector<16x128xf32> to vector<16x128xbf16>
    %c0_4 = arith.constant 0 : index
    %c0_5 = arith.constant 0 : index
    %c0_6 = arith.constant 0 : index
    %6 = vector.load %arg3[%c0_4, %c0_5, %c0_6] : memref<2x128x128xbf16, #tpu.memory_space<vmem>>, vector<1x128x128xbf16>
    %7 = vector.shape_cast %6 : vector<1x128x128xbf16> to vector<128x128xbf16>
    %cst_7 = arith.constant dense<0.000000e+00> : vector<16x128xf32>
    %8 = tpu.matmul %5, %7, %cst_7 {dimension_numbers = #tpu.dot_dimension_numbers<[1], [0], [0], [1], [0, 0, 1, 1], [], []>} : vector<16x128xbf16>, vector<128x128xbf16>, vector<16x128xf32> -> vector<16x128xf32>
    %c0_8 = arith.constant 0 : index
    %c0_9 = arith.constant 0 : index
    %c0_10 = arith.constant 0 : index
    %9 = vector.load %arg4[%c0_8, %c0_9, %c0_10] : memref<2x1x128xf32, #tpu.memory_space<vmem>>, vector<1x1x128xf32>
    %10 = vector.shape_cast %9 : vector<1x1x128xf32> to vector<1x128xf32>
    %11 = vector.broadcast %10 : vector<1x128xf32> to vector<16x128xf32>
    %12 = arith.addf %8, %11 : vector<16x128xf32>
    %cst_11 = arith.constant 0.000000e+00 : f32
    %13 = vector.broadcast %cst_11 : f32 to vector<16x128xf32>
    %14 = arith.maximumf %12, %13 : vector<16x128xf32>
    %15 = arith.truncf %14 : vector<16x128xf32> to vector<16x128xbf16>
    %cst_12 = arith.constant dense<0.000000e+00> : vector<16x128xf32>
    %16 = tpu.matmul %1, %15, %cst_12 {dimension_numbers = #tpu.dot_dimension_numbers<[1], [0], [0], [1], [0, 0, 1, 1], [], []>} : vector<16x16xbf16>, vector<16x128xbf16>, vector<16x128xf32> -> vector<16x128xf32>
    %17 = arith.truncf %16 : vector<16x128xf32> to vector<16x128xbf16>
    %c1 = arith.constant 1 : index
    %c0_13 = arith.constant 0 : index
    %c0_14 = arith.constant 0 : index
    %18 = vector.load %arg3[%c1, %c0_13, %c0_14] : memref<2x128x128xbf16, #tpu.memory_space<vmem>>, vector<1x128x128xbf16>
    %19 = vector.shape_cast %18 : vector<1x128x128xbf16> to vector<128x128xbf16>
    %cst_15 = arith.constant dense<0.000000e+00> : vector<16x128xf32>
    %20 = tpu.matmul %17, %19, %cst_15 {dimension_numbers = #tpu.dot_dimension_numbers<[1], [0], [0], [1], [0, 0, 1, 1], [], []>} : vector<16x128xbf16>, vector<128x128xbf16>, vector<16x128xf32> -> vector<16x128xf32>
    %c1_16 = arith.constant 1 : index
    %c0_17 = arith.constant 0 : index
    %c0_18 = arith.constant 0 : index
    %21 = vector.load %arg4[%c1_16, %c0_17, %c0_18] : memref<2x1x128xf32, #tpu.memory_space<vmem>>, vector<1x1x128xf32>
    %22 = vector.shape_cast %21 : vector<1x1x128xf32> to vector<1x128xf32>
    %23 = vector.broadcast %22 : vector<1x128xf32> to vector<16x128xf32>
    %24 = arith.addf %20, %23 : vector<16x128xf32>
    %cst_19 = arith.constant 0.000000e+00 : f32
    %25 = vector.broadcast %cst_19 : f32 to vector<16x128xf32>
    %26 = arith.maximumf %24, %25 : vector<16x128xf32>
    %27 = arith.addf %26, %14 : vector<16x128xf32>
    %cst_20 = arith.constant dense<0.000000e+00> : vector<128xf32>
    %28 = vector.multi_reduction <add>, %27, %cst_20 [0] : vector<16x128xf32> to vector<128xf32>
    %29 = vector.shape_cast %28 : vector<128xf32> to vector<1x128xf32>
    %30 = arith.truncf %29 : vector<1x128xf32> to vector<1x128xbf16>
    %c0_21 = arith.constant 0 : index
    %c0_22 = arith.constant 0 : index
    %31 = vector.load %arg5[%c0_21, %c0_22] : memref<128x128xbf16, #tpu.memory_space<vmem>>, vector<128x128xbf16>
    %cst_23 = arith.constant dense<0.000000e+00> : vector<1x128xf32>
    %32 = tpu.matmul %30, %31, %cst_23 {dimension_numbers = #tpu.dot_dimension_numbers<[1], [0], [0], [1], [0, 0, 1, 1], [], []>} : vector<1x128xbf16>, vector<128x128xbf16>, vector<1x128xf32> -> vector<1x128xf32>
    %c0_24 = arith.constant 0 : index
    %c0_25 = arith.constant 0 : index
    %33 = vector.load %arg6[%c0_24, %c0_25] : memref<1x128xf32, #tpu.memory_space<vmem>>, vector<1x128xf32>
    %34 = arith.addf %32, %33 : vector<1x128xf32>
    %35 = vector.shape_cast %34 : vector<1x128xf32> to vector<1x1x128xf32>
    %c0_26 = arith.constant 0 : index
    %c0_27 = arith.constant 0 : index
    %c0_28 = arith.constant 0 : index
    %36 = vector.load %arg7[%c0_26, %c0_27, %c0_28] : memref<1x1x128xf32, #tpu.memory_space<vmem>>, vector<1x1x128xf32>
    tpu.vector_store %arg7[%c0_26, %c0_27, %c0_28], %35 {strides = array<i32>} : memref<1x1x128xf32, #tpu.memory_space<vmem>>, vector<1x1x128xf32>,
    return
  }
  func.func @transform_0(%arg0: i32) -> (i32, i32, i32) {
    %c0_i32 = arith.constant 0 : i32
    %c0_i32_0 = arith.constant 0 : i32
    %c0_i32_1 = arith.constant 0 : i32
    return %arg0, %c0_i32, %c0_i32_0 : i32, i32, i32
  }
  func.func @transform_1(%arg0: i32) -> (i32, i32) {
    %c0_i32 = arith.constant 0 : i32
    %c0_i32_0 = arith.constant 0 : i32
    return %arg0, %c0_i32 : i32, i32
  }
  func.func @transform_2(%arg0: i32) -> (i32, i32, i32) {
    %c0_i32 = arith.constant 0 : i32
    %c0_i32_0 = arith.constant 0 : i32
    %c0_i32_1 = arith.constant 0 : i32
    %c0_i32_2 = arith.constant 0 : i32
    return %c0_i32, %c0_i32_0, %c0_i32_1 : i32, i32, i32
  }
  func.func @transform_3(%arg0: i32) -> (i32, i32, i32) {
    %c0_i32 = arith.constant 0 : i32
    %c0_i32_0 = arith.constant 0 : i32
    %c0_i32_1 = arith.constant 0 : i32
    %c0_i32_2 = arith.constant 0 : i32
    return %c0_i32, %c0_i32_0, %c0_i32_1 : i32, i32, i32
  }
  func.func @transform_4(%arg0: i32) -> (i32, i32) {
    %c0_i32 = arith.constant 0 : i32
    %c0_i32_0 = arith.constant 0 : i32
    %c0_i32_1 = arith.constant 0 : i32
    return %c0_i32, %c0_i32_0 : i32, i32
  }
  func.func @transform_5(%arg0: i32) -> (i32, i32) {
    %c0_i32 = arith.constant 0 : i32
    %c0_i32_0 = arith.constant 0 : i32
    %c0_i32_1 = arith.constant 0 : i32
    return %c0_i32, %c0_i32_0 : i32, i32
  }
  func.func @transform_6(%arg0: i32) -> (i32, i32, i32) {
    %c0_i32 = arith.constant 0 : i32
    %c0_i32_0 = arith.constant 0 : i32
    %c0_i32_1 = arith.constant 0 : i32
    return %arg0, %c0_i32, %c0_i32_0 : i32, i32, i32
  }
}

</mosaic_0001>

<llo_original>
// kernel: mask_gcn_forward.1
$region0: #{mask_gcn_forward.1}
  #allocation0 [shape = 'u32[]', space=smem, size = 0x4, offset = 0x4, fixed_abs, tag = 'smem constant byte address 0x4 - core index']
  #allocation1 [shape = 'u32[144,128]{1,0:T(1,128)}', space=vmem, size = 0x12000, scoped, tag = 'internal scratch']
  %s0 = inlined_call_operand.vmem [shape: bf16[4,16,16], index: 0, kind: input, shape index: {}]
  %s1 = inlined_call_operand.vmem [shape: f32[64,128], index: 1, kind: input, shape index: {}]
  %s2 = inlined_call_operand.vmem [shape: bf16[2,128,128], index: 2, kind: input, shape index: {}]
  %s3 = inlined_call_operand.vmem [shape: f32[2,1,128], index: 3, kind: input, shape index: {}]
  %s4 = inlined_call_operand.vmem [shape: bf16[128,128], index: 4, kind: input, shape index: {}]
  %s5 = inlined_call_operand.vmem [shape: f32[1,128], index: 5, kind: input, shape index: {}]
  %s6 = inlined_call_operand.hbm [shape: f32[4,1,128], index: 6, kind: output, shape index: {}]
  %s7 = sld [smem:[#allocation0]]
  $region57: #{mask_gcn_forward.1} parent=0
    _
  %s9 = ssub.s32 1, %s7
  %s10 = scalar_select 0, %s9, %s7
  $region1: #{mask_gcn_forward.1} parent=0
    #allocation2 [shape = 'u8[1024]{0}', space=vmem, size = 0x400, scoped, tag = 'output window, operand 0']
    #allocation3 [shape = 's32[2]{0}', space=sflag, size = 0x8, scoped, tag = 'scoped memory for mask_gcn_forward.1']
    %11 = vsyncpa [#allocation3], 0
    %s12 = scalar_lea.sflag [#allocation3], 1
    %13 = vsyncpa %s12, 0
    loop: start=0, step=1, limit=6
    $region2: #{mask_gcn_forward.1} parent=1 // loop_pre_header
      _
    $region3: #{mask_gcn_forward.1} parent=1 // loop_header
      %s15 = sphi 0, %s19
      %p16 = scmp.ge.s32.totalorder %s15, 6
      %s25 = sphi 0, %s27
      %s28 = sphi 0, %s25
      %s29 = sphi 0, %s28
      %s45 = sphi 0, %s29
      %s51 = sphi 0, %s53
      %s54 = sphi 0, %s51
      %s55 = sphi 0, %s54
      %s71 = sphi 0, %s55
      %s75 = sphi 0, %s75
      %s77 = sphi 0, %s75
      %s78 = sphi 0, %s77
      %s92 = sphi 0, %s78
      %s96 = sphi 0, %s96
      %s98 = sphi 0, %s96
      %s99 = sphi 0, %s98
      %s113 = sphi 0, %s99
      %s117 = sphi 0, %s117
      %s119 = sphi 0, %s117
      %s120 = sphi 0, %s119
      %s134 = sphi 0, %s120
      %s138 = sphi 0, %s138
      %s140 = sphi 0, %s138
      %s141 = sphi 0, %s140
      %s155 = sphi 0, %s141
      %s161 = sphi 0, %s163
      %s164 = sphi 0, %s161
      %s165 = sphi 0, %s164
      %s181 = sphi 0, %s165
    $region4: #{mask_gcn_forward.1} parent=1 // loop_header_branch
      %18 = sbr.rel (%p16) target = $region8
    $region5: #{mask_gcn_forward.1} parent=1 // loop_body
      %s20 = ssub.s32 %s15, 1
      %s21 = ssub.s32 %s15, 2
      %s22 = sadd.s32 %s15, 1
      %s23 = ssub.s32 %s15, %s22
      %p24 = scmp.eq.s32.totalorder %s23, 0
      %s26 = sadd.s32 %s25, 1
      %s27 = scalar_select %p24, %s25, %s26
      %p30 = pneg %p24
      %p31 = scmp.eq.s32.totalorder %s15, 3
      %p32 = por %p30, %p31
      %p33 = scmp.ne.s32.totalorder %s25, %s28
      %p34 = scmp.eq.s32.totalorder %s15, 0
      %p35 = por %p33, %p34
      %p36 = scmp.ne.s32.totalorder %s25, %s28
      %p37 = scmp.eq.s32.totalorder %s20, 3
      %p38 = por %p36, %p37
      %p39 = scmp.ne.s32.totalorder %s28, %s29
      %p40 = scmp.eq.s32.totalorder %s20, 0
      %p41 = por %p39, %p40
      %p42 = scmp.ne.s32.totalorder %s28, %s29
      %p43 = scmp.eq.s32.totalorder %s21, 3
      %p44 = por %p42, %p43
      %p46 = scmp.ne.s32.totalorder %s29, %s45
      %p47 = scmp.eq.s32.totalorder %s21, 0
      %p48 = por %p46, %p47
      %s49 = ssub.s32 %s15, %s22
      %p50 = scmp.eq.s32.totalorder %s49, 0
      %s52 = sadd.s32 %s51, 1
      %s53 = scalar_select %p50, %s51, %s52
      %p56 = pneg %p50
      %p57 = scmp.eq.s32.totalorder %s15, 3
      %p58 = por %p56, %p57
      %p59 = scmp.ne.s32.totalorder %s51, %s54
      %p60 = scmp.eq.s32.totalorder %s15, 0
      %p61 = por %p59, %p60
      %p62 = scmp.ne.s32.totalorder %s51, %s54
      %p63 = scmp.eq.s32.totalorder %s20, 3
      %p64 = por %p62, %p63
      %p65 = scmp.ne.s32.totalorder %s54, %s55
      %p66 = scmp.eq.s32.totalorder %s20, 0
      %p67 = por %p65, %p66
      %p68 = scmp.ne.s32.totalorder %s54, %s55
      %p69 = scmp.eq.s32.totalorder %s21, 3
      %p70 = por %p68, %p69
      %p72 = scmp.ne.s32.totalorder %s55, %s71
      %p73 = scmp.eq.s32.totalorder %s21, 0
      %p74 = por %p72, %p73
      %s76 = sadd.s32 %s75, 1
      %p79 = scmp.eq.s32.totalorder %s15, 3
      %p80 = scmp.ne.s32.totalorder %s75, %s77
      %p81 = scmp.eq.s32.totalorder %s15, 0
      %p82 = por %p80, %p81
      %p83 = scmp.ne.s32.totalorder %s75, %s77
      %p84 = scmp.eq.s32.totalorder %s20, 3
      %p85 = por %p83, %p84
      %p86 = scmp.ne.s32.totalorder %s77, %s78
      %p87 = scmp.eq.s32.totalorder %s20, 0
      %p88 = por %p86, %p87
      %p89 = scmp.ne.s32.totalorder %s77, %s78
      %p90 = scmp.eq.s32.totalorder %s21, 3
      %p91 = por %p89, %p90
      %p93 = scmp.ne.s32.totalorder %s78, %s92
      %p94 = scmp.eq.s32.totalorder %s21, 0
      %p95 = por %p93, %p94
      %s97 = sadd.s32 %s96, 1
      %p100 = scmp.eq.s32.totalorder %s15, 3
      %p101 = scmp.ne.s32.totalorder %s96, %s98
      %p102 = scmp.eq.s32.totalorder %s15, 0
      %p103 = por %p101, %p102
      %p104 = scmp.ne.s32.totalorder %s96, %s98
      %p105 = scmp.eq.s32.totalorder %s20, 3
      %p106 = por %p104, %p105
      %p107 = scmp.ne.s32.totalorder %s98, %s99
      %p108 = scmp.eq.s32.totalorder %s20, 0
      %p109 = por %p107, %p108
      %p110 = scmp.ne.s32.totalorder %s98, %s99
      %p111 = scmp.eq.s32.totalorder %s21, 3
      %p112 = por %p110, %p111
      %p114 = scmp.ne.s32.totalorder %s99, %s113
      %p115 = scmp.eq.s32.totalorder %s21, 0
      %p116 = por %p114, %p115
      %s118 = sadd.s32 %s117, 1
      %p121 = scmp.eq.s32.totalorder %s15, 3
      %p122 = scmp.ne.s32.totalorder %s117, %s119
      %p123 = scmp.eq.s32.totalorder %s15, 0
      %p124 = por %p122, %p123
      %p125 = scmp.ne.s32.totalorder %s117, %s119
      %p126 = scmp.eq.s32.totalorder %s20, 3
      %p127 = por %p125, %p126
      %p128 = scmp.ne.s32.totalorder %s119, %s120
      %p129 = scmp.eq.s32.totalorder %s20, 0
      %p130 = por %p128, %p129
      %p131 = scmp.ne.s32.totalorder %s119, %s120
      %p132 = scmp.eq.s32.totalorder %s21, 3
      %p133 = por %p131, %p132
      %p135 = scmp.ne.s32.totalorder %s120, %s134
      %p136 = scmp.eq.s32.totalorder %s21, 0
      %p137 = por %p135, %p136
      %s139 = sadd.s32 %s138, 1
      %p142 = scmp.eq.s32.totalorder %s15, 3
      %p143 = scmp.ne.s32.totalorder %s138, %s140
      %p144 = scmp.eq.s32.totalorder %s15, 0
      %p145 = por %p143, %p144
      %p146 = scmp.ne.s32.totalorder %s138, %s140
      %p147 = scmp.eq.s32.totalorder %s20, 3
      %p148 = por %p146, %p147
      %p149 = scmp.ne.s32.totalorder %s140, %s141
      %p150 = scmp.eq.s32.totalorder %s20, 0
      %p151 = por %p149, %p150
      %p152 = scmp.ne.s32.totalorder %s140, %s141
      %p153 = scmp.eq.s32.totalorder %s21, 3
      %p154 = por %p152, %p153
      %p156 = scmp.ne.s32.totalorder %s141, %s155
      %p157 = scmp.eq.s32.totalorder %s21, 0
      %p158 = por %p156, %p157
      %s159 = ssub.s32 %s15, %s22
      %p160 = scmp.eq.s32.totalorder %s159, 0
      %s162 = sadd.s32 %s161, 1
      %s163 = scalar_select %p160, %s161, %s162
      %p166 = pneg %p160
      %p167 = scmp.eq.s32.totalorder %s15, 3
      %p168 = por %p166, %p167
      %p169 = scmp.ne.s32.totalorder %s161, %s164
      %p170 = scmp.eq.s32.totalorder %s15, 0
      %p171 = por %p169, %p170
      %p172 = scmp.ne.s32.totalorder %s161, %s164
      %p173 = scmp.eq.s32.totalorder %s20, 3
      %p174 = por %p172, %p173
      %p175 = scmp.ne.s32.totalorder %s164, %s165
      %p176 = scmp.eq.s32.totalorder %s20, 0
      %p177 = por %p175, %p176
      %p178 = scmp.ne.s32.totalorder %s164, %s165
      %p179 = scmp.eq.s32.totalorder %s21, 3
      %p180 = por %p178, %p179
      %p182 = scmp.ne.s32.totalorder %s165, %s181
      %p183 = scmp.eq.s32.totalorder %s21, 0
      %p184 = por %p182, %p183
      %p185 = scmp.le.s32.totalorder 1, %s15
      %p186 = scmp.lt.s32.totalorder %s15, 5
      %p187 = pnand %p185, %p186
      %p188 = pneg %p187
      // Predicated region
      $region9: #{mask_gcn_forward.1} parent=5 // pred_check
        _
      $region10: #{mask_gcn_forward.1} parent=5 // pred_check_branch
        %190 = sbr.rel (%p187) target = $region12
      $region11: #{mask_gcn_forward.1} parent=5 // pred_region
        %s191 = ssub.s32 %s15, 1
        // Predicated region
        $region13: #{mask_gcn_forward.1} parent=11 // pred_check
          %p192 = pneg %p88
        $region14: #{mask_gcn_forward.1} parent=11 // pred_check_branch
          %194 = sbr.rel (%p192) target = $region16
        $region15: #{mask_gcn_forward.1} parent=11 // pred_region
          _
        $region16: #{mask_gcn_forward.1} parent=11 // pred_fallthru
          _
        // Predicated region
        $region17: #{mask_gcn_forward.1} parent=11 // pred_check
          %p195 = pneg %p109
        $region18: #{mask_gcn_forward.1} parent=11 // pred_check_branch
          %197 = sbr.rel (%p195) target = $region20
        $region19: #{mask_gcn_forward.1} parent=11 // pred_region
          _
        $region20: #{mask_gcn_forward.1} parent=11 // pred_fallthru
          _
        // Predicated region
        $region21: #{mask_gcn_forward.1} parent=11 // pred_check
          %p198 = pneg %p130
        $region22: #{mask_gcn_forward.1} parent=11 // pred_check_branch
          %200 = sbr.rel (%p198) target = $region24
        $region23: #{mask_gcn_forward.1} parent=11 // pred_region
          _
        $region24: #{mask_gcn_forward.1} parent=11 // pred_fallthru
          _
        // Predicated region
        $region25: #{mask_gcn_forward.1} parent=11 // pred_check
          %p201 = pneg %p151
        $region26: #{mask_gcn_forward.1} parent=11 // pred_check_branch
          %203 = sbr.rel (%p201) target = $region28
        $region27: #{mask_gcn_forward.1} parent=11 // pred_region
          _
        $region28: #{mask_gcn_forward.1} parent=11 // pred_fallthru
          _
      $region12: #{mask_gcn_forward.1} parent=5 // pred_fallthru
        _
      %p204 = scmp.lt.s32.totalorder %s15, 4
      // Predicated region
      $region29: #{mask_gcn_forward.1} parent=5 // pred_check
        %p205 = pneg %p204
      $region30: #{mask_gcn_forward.1} parent=5 // pred_check_branch
        %207 = sbr.rel (%p205) target = $region32
      $region31: #{mask_gcn_forward.1} parent=5 // pred_region
        // Predicated region
        $region33: #{mask_gcn_forward.1} parent=31 // pred_check
          %p208 = pneg %p35
        $region34: #{mask_gcn_forward.1} parent=31 // pred_check_branch
          %210 = sbr.rel (%p208) target = $region36
        $region35: #{mask_gcn_forward.1} parent=31 // pred_region
          %p211 = scmp.lt.s32.totalorder %s15, 3
          %s212 = scalar_select %p211, %s15, 3
          %s213 = smul.addr %s212, 2
          %s214 = smul.addr %s213, 4
          %s215 = scalar_lea.vmem %s0, %s214
        $region36: #{mask_gcn_forward.1} parent=31 // pred_fallthru
          _
        // Predicated region
        $region37: #{mask_gcn_forward.1} parent=31 // pred_check
          %p216 = pneg %p61
        $region38: #{mask_gcn_forward.1} parent=31 // pred_check_branch
          %218 = sbr.rel (%p216) target = $region40
        $region39: #{mask_gcn_forward.1} parent=31 // pred_region
          %s219 = smul.u32 2, %s15
          %p220 = scmp.lt.s32.totalorder %s219, 7
          %s221 = scalar_select %p220, %s219, 7
          %s222 = smul.addr %s221, 8
          %s223 = scalar_lea.vmem %s1, %s222
          %s224 = smul.u32 2, %s15
        $region40: #{mask_gcn_forward.1} parent=31 // pred_fallthru
          _
      $region32: #{mask_gcn_forward.1} parent=5 // pred_fallthru
        _
      %p225 = scmp.le.s32.totalorder 1, %s15
      %p226 = scmp.lt.s32.totalorder %s15, 5
      %p227 = pnand %p225, %p226
      %p228 = pneg %p227
      // Predicated region
      $region41: #{mask_gcn_forward.1} parent=5 // pred_check
        _
      $region42: #{mask_gcn_forward.1} parent=5 // pred_check_branch
        %230 = sbr.rel (%p227) target = $region44
      $region43: #{mask_gcn_forward.1} parent=5 // pred_region
        %s231 = ssub.s32 %s15, 1
        %p232 = scmp.lt.s32.totalorder %s20, 3
        %s233 = scalar_select %p232, %s20, 3
        %s234 = smul.addr %s233, 2
        %s235 = smul.addr %s234, 4
        %s236 = scalar_lea.vmem %s0, %s235
        %p237 = pneg %p41
        %p238 = pneg %p38
        %s239 = smul.u32 2, %s20
        %p240 = scmp.lt.s32.totalorder %s239, 7
        %s241 = scalar_select %p240, %s239, 7
        %s242 = smul.addr %s241, 8
        %s243 = scalar_lea.vmem %s1, %s242
        %p244 = pneg %p67
        %p245 = pneg %p64
        %p246 = pneg %p88
        %p247 = pneg %p85
        %p248 = pneg %p109
        %p249 = pneg %p106
        %p250 = pneg %p130
        %p251 = pneg %p127
        %p252 = pneg %p151
        %p253 = pneg %p148
        %p254 = pneg %p177
        %p255 = pneg %p174
        %s256 = sand.u32 %s164, 1
        %s257 = scalar_lea.sflag [#allocation3], %s256
        %s258 = sand.u32 %s164, 1
        %s259 = scalar_lea.vmem [#allocation2], %s258
        %p260 = scmp.lt.s32.totalorder %s20, 3
        %s261 = scalar_select %p260, %s20, 3
        %s262 = smul.addr %s261, 2
        %s263 = smul.addr %s262, 4
        %s264 = scalar_lea.vmem %s0, %s263
        %s265 = smul.u32 2, %s20
        %p266 = scmp.lt.s32.totalorder %s265, 7
        %s267 = scalar_select %p266, %s265, 7
        %s268 = smul.addr %s267, 8
        %s269 = scalar_lea.vmem %s1, %s268
        %s270 = smul.u32 2, %s20
        %v272 = vld [vmem:[%s264] sm:$0xf]
        %v273 = vld [vmem:[%s264 + $0x4] sm:$0xf]
        %v274 = vld [vmem:[%s269] sm:$0xff]
        %v275 = vld [vmem:[%s269 + $0x8] sm:$0xff]
        %v276 = vpack.c.bf16 %v275, %v274
        %v279 = vunpack.c.l.b16 %v272
        %v280 = vunpack.c.l.b16 %v273
        %v281 = vpack.c.b16 %v280, %v279
        %vm282 = vcmask 130048
        %v284 = vsel %vm282, %v281, 0
        %286 = vmatprep.subr.bf16.mxu0 0
        %287 = vmatpush1.bf16.msra.mxu0 %v276
        %288 = vmatprep.subr.bf16.mxu0 0
        %289 = vmatpush1.bf16.msra.mxu0 0
        %290 = vmatprep.subr.bf16.mxu0 0
        %291 = vmatpush1.bf16.msra.mxu0 0
        %292 = vmatprep.subr.bf16.mxu0 0
        %293 = vmatpush1.bf16.msra.mxu0 0
        %294 = vmatprep.subr.bf16.mxu0 0
        %295 = vmatpush1.bf16.msra.mxu0 0
        %296 = vmatprep.subr.bf16.mxu0 0
        %297 = vmatpush1.bf16.msra.mxu0 0
        %298 = vmatprep.subr.bf16.mxu0 0
        %299 = vmatpush1.bf16.msra.mxu0 0
        %300 = vmatprep.subr.bf16.mxu0 0
        %301 = vmatpush1.bf16.msra.mxu0 0
        %302 = vmatprep.subr.bf16.mxu0 0
        %303 = vmatpush1.bf16.msra.mxu0 0
        %304 = vmatprep.subr.bf16.mxu0 0
        %305 = vmatpush1.bf16.msra.mxu0 0
        %306 = vmatprep.subr.bf16.mxu0 0
        %307 = vmatpush1.bf16.msra.mxu0 0
        %308 = vmatprep.subr.bf16.mxu0 0
        %309 = vmatpush1.bf16.msra.mxu0 0
        %310 = vmatprep.subr.bf16.mxu0 0
        %311 = vmatpush1.bf16.msra.mxu0 0
        %312 = vmatprep.subr.bf16.mxu0 0
        %313 = vmatpush1.bf16.msra.mxu0 0
        %314 = vmatprep.subr.bf16.mxu0 0
        %315 = vmatpush1.bf16.msra.mxu0 0
        %316 = vmatprep.subr.bf16.mxu0 0
        %317 = vmatpush1.bf16.msra.mxu0 0
        %318 = vmatprep.mubr.bf16.mxu0 0
        %319 = vmatmul.mubr.bf16.gmra.mrb[0].mxu0 %v284
        %v320 = vpop.f32.mrb[0].mxu0
        %v321 = vadd.f32 0.0, %v320
        %v322 = vpop.f32.mrb[0].mxu0
        %v323 = vpop.f32.mrb[0].mxu0
        %v324 = vadd.f32 0.0, %v323
        %v325 = vpop.f32.mrb[0].mxu0
        %326 = vdwg.mxu0
        %v327 = vpack.c.bf16 %v324, %v321
        %v328 = vld [vmem:[%s2] sm:$0xf]
        %v329 = vld [vmem:[%s2 + $0x4] sm:$0xf]
        %v330 = vld [vmem:[%s2 + $0x8] sm:$0xf]
        %v331 = vld [vmem:[%s2 + $0xc] sm:$0xf]
        %v332 = vld [vmem:[%s2 + $0x10] sm:$0xf]
        %v333 = vld [vmem:[%s2 + $0x14] sm:$0xf]
        %v334 = vld [vmem:[%s2 + $0x18] sm:$0xf]
        %v335 = vld [vmem:[%s2 + $0x1c] sm:$0xf]
        %v336 = vld [vmem:[%s2 + $0x20] sm:$0xf]
        %v337 = vld [vmem:[%s2 + $0x24] sm:$0xf]
        %v338 = vld [vmem:[%s2 + $0x28] sm:$0xf]
        %v339 = vld [vmem:[%s2 + $0x2c] sm:$0xf]
        %v340 = vld [vmem:[%s2 + $0x30] sm:$0xf]
        %v341 = vld [vmem:[%s2 + $0x34] sm:$0xf]
        %v342 = vld [vmem:[%s2 + $0x38] sm:$0xf]
        %v343 = vld [vmem:[%s2 + $0x3c] sm:$0xf]
        %v344 = vld [vmem:[%s3] sm:$0x1]
        %v346 = vlaneseq
        %v347 = vshrl.u32 %v346, 7
        %v348 = vsub.s32 0, %v347
        %v349 = vrot.slane %v344, %v348
        %v367 = vunpack.c.l.b16 %v328
        %v368 = vunpack.c.l.b16 %v329
        %v369 = vunpack.c.l.b16 %v330
        %v370 = vunpack.c.l.b16 %v331
        %v371 = vunpack.c.l.b16 %v332
        %v372 = vunpack.c.l.b16 %v333
        %v373 = vunpack.c.l.b16 %v334
        %v374 = vunpack.c.l.b16 %v335
        %v375 = vunpack.c.l.b16 %v336
        %v376 = vunpack.c.l.b16 %v337
        %v377 = vunpack.c.l.b16 %v338
        %v378 = vunpack.c.l.b16 %v339
        %v379 = vunpack.c.l.b16 %v340
        %v380 = vunpack.c.l.b16 %v341
        %v381 = vunpack.c.l.b16 %v342
        %v382 = vunpack.c.l.b16 %v343
        %v383 = vpack.c.b16 %v368, %v367
        %v384 = vpack.c.b16 %v370, %v369
        %v385 = vpack.c.b16 %v372, %v371
        %v386 = vpack.c.b16 %v374, %v373
        %v387 = vpack.c.b16 %v376, %v375
        %v388 = vpack.c.b16 %v378, %v377
        %v389 = vpack.c.b16 %v380, %v379
        %v390 = vpack.c.b16 %v382, %v381
        %399 = vmatprep.subr.bf16.mxu0 0
        %400 = vmatpush1.bf16.msra.mxu0 %v383
        %401 = vmatprep.subr.bf16.mxu0 0
        %402 = vmatpush1.bf16.msra.mxu0 %v384
        %403 = vmatprep.subr.bf16.mxu0 0
        %404 = vmatpush1.bf16.msra.mxu0 %v385
        %405 = vmatprep.subr.bf16.mxu0 0
        %406 = vmatpush1.bf16.msra.mxu0 %v386
        %407 = vmatprep.subr.bf16.mxu0 0
        %408 = vmatpush1.bf16.msra.mxu0 %v387
        %409 = vmatprep.subr.bf16.mxu0 0
        %410 = vmatpush1.bf16.msra.mxu0 %v388
        %411 = vmatprep.subr.bf16.mxu0 0
        %412 = vmatpush1.bf16.msra.mxu0 %v389
        %413 = vmatprep.subr.bf16.mxu0 0
        %414 = vmatpush1.bf16.msra.mxu0 %v390
        %415 = vmatprep.subr.bf16.mxu0 0
        %416 = vmatpush1.bf16.msra.mxu0 0
        %417 = vmatprep.subr.bf16.mxu0 0
        %418 = vmatpush1.bf16.msra.mxu0 0
        %419 = vmatprep.subr.bf16.mxu0 0
        %420 = vmatpush1.bf16.msra.mxu0 0
        %421 = vmatprep.subr.bf16.mxu0 0
        %422 = vmatpush1.bf16.msra.mxu0 0
        %423 = vmatprep.subr.bf16.mxu0 0
        %424 = vmatpush1.bf16.msra.mxu0 0
        %425 = vmatprep.subr.bf16.mxu0 0
        %426 = vmatpush1.bf16.msra.mxu0 0
        %427 = vmatprep.subr.bf16.mxu0 0
        %428 = vmatpush1.bf16.msra.mxu0 0
        %429 = vmatprep.subr.bf16.mxu0 0
        %430 = vmatpush1.bf16.msra.mxu0 0
        %431 = vmatprep.mubr.bf16.mxu0 0
        %432 = vmatmul.mubr.bf16.gmra.mrb[0].mxu0 %v327
        %v433 = vpop.f32.mrb[0].mxu0
        %v434 = vadd.f32 %v349, %v433
        %v435 = vpop.f32.mrb[0].mxu0
        %v436 = vpop.f32.mrb[0].mxu0
        %v437 = vadd.f32 %v349, %v436
        %v438 = vpop.f32.mrb[0].mxu0
        %439 = vdwg.mxu0
        %v440 = vmax.f32 %v434, 0.0
        %v441 = vmax.f32 %v437, 0.0
        %v442 = vpack.c.bf16 %v441, %v440
        %443 = vmatprep.subr.bf16.mxu0 0
        %444 = vmatpush1.bf16.msra.mxu0 %v442
        %445 = vmatprep.subr.bf16.mxu0 0
        %446 = vmatpush1.bf16.msra.mxu0 0
        %447 = vmatprep.subr.bf16.mxu0 0
        %448 = vmatpush1.bf16.msra.mxu0 0
        %449 = vmatprep.subr.bf16.mxu0 0
        %450 = vmatpush1.bf16.msra.mxu0 0
        %451 = vmatprep.subr.bf16.mxu0 0
        %452 = vmatpush1.bf16.msra.mxu0 0
        %453 = vmatprep.subr.bf16.mxu0 0
        %454 = vmatpush1.bf16.msra.mxu0 0
        %455 = vmatprep.subr.bf16.mxu0 0
        %456 = vmatpush1.bf16.msra.mxu0 0
        %457 = vmatprep.subr.bf16.mxu0 0
        %458 = vmatpush1.bf16.msra.mxu0 0
        %459 = vmatprep.subr.bf16.mxu0 0
        %460 = vmatpush1.bf16.msra.mxu0 0
        %461 = vmatprep.subr.bf16.mxu0 0
        %462 = vmatpush1.bf16.msra.mxu0 0
        %463 = vmatprep.subr.bf16.mxu0 0
        %464 = vmatpush1.bf16.msra.mxu0 0
        %465 = vmatprep.subr.bf16.mxu0 0
        %466 = vmatpush1.bf16.msra.mxu0 0
        %467 = vmatprep.subr.bf16.mxu0 0
        %468 = vmatpush1.bf16.msra.mxu0 0
        %469 = vmatprep.subr.bf16.mxu0 0
        %470 = vmatpush1.bf16.msra.mxu0 0
        %471 = vmatprep.subr.bf16.mxu0 0
        %472 = vmatpush1.bf16.msra.mxu0 0
        %473 = vmatprep.subr.bf16.mxu0 0
        %474 = vmatpush1.bf16.msra.mxu0 0
        %475 = vmatprep.mubr.bf16.mxu0 0
        %476 = vmatmul.mubr.bf16.gmra.mrb[0].mxu0 %v284
        %v477 = vpop.f32.mrb[0].mxu0
        %v478 = vadd.f32 0.0, %v477
        %v479 = vpop.f32.mrb[0].mxu0
        %v480 = vpop.f32.mrb[0].mxu0
        %v481 = vadd.f32 0.0, %v480
        %v482 = vpop.f32.mrb[0].mxu0
        %483 = vdwg.mxu0
        %v484 = vpack.c.bf16 %v481, %v478
        %s485 = scalar_lea.vmem %s2, 64
        %v486 = vld [vmem:[%s485] sm:$0xf]
        %v487 = vld [vmem:[%s485 + $0x4] sm:$0xf]
        %v488 = vld [vmem:[%s485 + $0x8] sm:$0xf]
        %v489 = vld [vmem:[%s485 + $0xc] sm:$0xf]
        %v490 = vld [vmem:[%s485 + $0x10] sm:$0xf]
        %v491 = vld [vmem:[%s485 + $0x14] sm:$0xf]
        %v492 = vld [vmem:[%s485 + $0x18] sm:$0xf]
        %v493 = vld [vmem:[%s485 + $0x1c] sm:$0xf]
        %v494 = vld [vmem:[%s485 + $0x20] sm:$0xf]
        %v495 = vld [vmem:[%s485 + $0x24] sm:$0xf]
        %v496 = vld [vmem:[%s485 + $0x28] sm:$0xf]
        %v497 = vld [vmem:[%s485 + $0x2c] sm:$0xf]
        %v498 = vld [vmem:[%s485 + $0x30] sm:$0xf]
        %v499 = vld [vmem:[%s485 + $0x34] sm:$0xf]
        %v500 = vld [vmem:[%s485 + $0x38] sm:$0xf]
        %v501 = vld [vmem:[%s485 + $0x3c] sm:$0xf]
        %s502 = scalar_lea.vmem %s3, 1
        %v503 = vld [vmem:[%s502] sm:$0x1]
        %v505 = vlaneseq
        %v506 = vshrl.u32 %v505, 7
        %v507 = vsub.s32 0, %v506
        %v508 = vrot.slane %v503, %v507
        %v526 = vunpack.c.l.b16 %v486
        %v527 = vunpack.c.l.b16 %v487
        %v528 = vunpack.c.l.b16 %v488
        %v529 = vunpack.c.l.b16 %v489
        %v530 = vunpack.c.l.b16 %v490
        %v531 = vunpack.c.l.b16 %v491
        %v532 = vunpack.c.l.b16 %v492
        %v533 = vunpack.c.l.b16 %v493
        %v534 = vunpack.c.l.b16 %v494
        %v535 = vunpack.c.l.b16 %v495
        %v536 = vunpack.c.l.b16 %v496
        %v537 = vunpack.c.l.b16 %v497
        %v538 = vunpack.c.l.b16 %v498
        %v539 = vunpack.c.l.b16 %v499
        %v540 = vunpack.c.l.b16 %v500
        %v541 = vunpack.c.l.b16 %v501
        %v542 = vpack.c.b16 %v527, %v526
        %v543 = vpack.c.b16 %v529, %v528
        %v544 = vpack.c.b16 %v531, %v530
        %v545 = vpack.c.b16 %v533, %v532
        %v546 = vpack.c.b16 %v535, %v534
        %v547 = vpack.c.b16 %v537, %v536
        %v548 = vpack.c.b16 %v539, %v538
        %v549 = vpack.c.b16 %v541, %v540
        %558 = vmatprep.subr.bf16.mxu0 0
        %559 = vmatpush1.bf16.msra.mxu0 %v542
        %560 = vmatprep.subr.bf16.mxu0 0
        %561 = vmatpush1.bf16.msra.mxu0 %v543
        %562 = vmatprep.subr.bf16.mxu0 0
        %563 = vmatpush1.bf16.msra.mxu0 %v544
        %564 = vmatprep.subr.bf16.mxu0 0
        %565 = vmatpush1.bf16.msra.mxu0 %v545
        %566 = vmatprep.subr.bf16.mxu0 0
        %567 = vmatpush1.bf16.msra.mxu0 %v546
        %568 = vmatprep.subr.bf16.mxu0 0
        %569 = vmatpush1.bf16.msra.mxu0 %v547
        %570 = vmatprep.subr.bf16.mxu0 0
        %571 = vmatpush1.bf16.msra.mxu0 %v548
        %572 = vmatprep.subr.bf16.mxu0 0
        %573 = vmatpush1.bf16.msra.mxu0 %v549
        %574 = vmatprep.subr.bf16.mxu0 0
        %575 = vmatpush1.bf16.msra.mxu0 0
        %576 = vmatprep.subr.bf16.mxu0 0
        %577 = vmatpush1.bf16.msra.mxu0 0
        %578 = vmatprep.subr.bf16.mxu0 0
        %579 = vmatpush1.bf16.msra.mxu0 0
        %580 = vmatprep.subr.bf16.mxu0 0
        %581 = vmatpush1.bf16.msra.mxu0 0
        %582 = vmatprep.subr.bf16.mxu0 0
        %583 = vmatpush1.bf16.msra.mxu0 0
        %584 = vmatprep.subr.bf16.mxu0 0
        %585 = vmatpush1.bf16.msra.mxu0 0
        %586 = vmatprep.subr.bf16.mxu0 0
        %587 = vmatpush1.bf16.msra.mxu0 0
        %588 = vmatprep.subr.bf16.mxu0 0
        %589 = vmatpush1.bf16.msra.mxu0 0
        %590 = vmatprep.mubr.bf16.mxu0 0
        %591 = vmatmul.mubr.bf16.gmra.mrb[0].mxu0 %v484
        %v592 = vpop.f32.mrb[0].mxu0
        %v593 = vadd.f32 %v508, %v592
        %v594 = vpop.f32.mrb[0].mxu0
        %v595 = vpop.f32.mrb[0].mxu0
        %v596 = vadd.f32 %v508, %v595
        %v597 = vpop.f32.mrb[0].mxu0
        %598 = vdwg.mxu0
        %v599 = vmax.f32 %v593, 0.0
        %v600 = vmax.f32 %v596, 0.0
        %v601 = vadd.f32 %v599, %v440
        %v602 = vadd.f32 %v600, %v441
        %v603 = vadd.f32 %v601, %v602
        %v604 = vrot.slane %v603, 4
        %v605 = vadd.f32 %v603, %v604
        %v606 = vrot.slane %v605, 2
        %v607 = vadd.f32 %v605, %v606
        %v608 = vrot.slane %v607, 1
        %v609 = vadd.f32 %v607, %v608
        %v610 = vpack.c.bf16 %v609, %v609
        %v611 = vld [vmem:[%s4] sm:$0xf]
        %v612 = vld [vmem:[%s4 + $0x4] sm:$0xf]
        %v613 = vld [vmem:[%s4 + $0x8] sm:$0xf]
        %v614 = vld [vmem:[%s4 + $0xc] sm:$0xf]
        %v615 = vld [vmem:[%s4 + $0x10] sm:$0xf]
        %v616 = vld [vmem:[%s4 + $0x14] sm:$0xf]
        %v617 = vld [vmem:[%s4 + $0x18] sm:$0xf]
        %v618 = vld [vmem:[%s4 + $0x1c] sm:$0xf]
        %v619 = vld [vmem:[%s4 + $0x20] sm:$0xf]
        %v620 = vld [vmem:[%s4 + $0x24] sm:$0xf]
        %v621 = vld [vmem:[%s4 + $0x28] sm:$0xf]
        %v622 = vld [vmem:[%s4 + $0x2c] sm:$0xf]
        %v623 = vld [vmem:[%s4 + $0x30] sm:$0xf]
        %v624 = vld [vmem:[%s4 + $0x34] sm:$0xf]
        %v625 = vld [vmem:[%s4 + $0x38] sm:$0xf]
        %v626 = vld [vmem:[%s4 + $0x3c] sm:$0xf]
        %v627 = vld [vmem:[%s5] sm:$0x1]
        %v644 = vunpack.c.l.b16 %v611
        %v645 = vunpack.c.l.b16 %v612
        %v646 = vunpack.c.l.b16 %v613
        %v647 = vunpack.c.l.b16 %v614
        %v648 = vunpack.c.l.b16 %v615
        %v649 = vunpack.c.l.b16 %v616
        %v650 = vunpack.c.l.b16 %v617
        %v651 = vunpack.c.l.b16 %v618
        %v652 = vunpack.c.l.b16 %v619
        %v653 = vunpack.c.l.b16 %v620
        %v654 = vunpack.c.l.b16 %v621
        %v655 = vunpack.c.l.b16 %v622
        %v656 = vunpack.c.l.b16 %v623
        %v657 = vunpack.c.l.b16 %v624
        %v658 = vunpack.c.l.b16 %v625
        %v659 = vunpack.c.l.b16 %v626
        %v660 = vpack.c.b16 %v645, %v644
        %v661 = vpack.c.b16 %v647, %v646
        %v662 = vpack.c.b16 %v649, %v648
        %v663 = vpack.c.b16 %v651, %v650
        %v664 = vpack.c.b16 %v653, %v652
        %v665 = vpack.c.b16 %v655, %v654
        %v666 = vpack.c.b16 %v657, %v656
        %v667 = vpack.c.b16 %v659, %v658
        %676 = vmatprep.subr.bf16.mxu0 0
        %677 = vmatpush1.bf16.msra.mxu0 %v660
        %678 = vmatprep.subr.bf16.mxu0 0
        %679 = vmatpush1.bf16.msra.mxu0 %v661
        %680 = vmatprep.subr.bf16.mxu0 0
        %681 = vmatpush1.bf16.msra.mxu0 %v662
        %682 = vmatprep.subr.bf16.mxu0 0
        %683 = vmatpush1.bf16.msra.mxu0 %v663
        %684 = vmatprep.subr.bf16.mxu0 0
        %685 = vmatpush1.bf16.msra.mxu0 %v664
        %686 = vmatprep.subr.bf16.mxu0 0
        %687 = vmatpush1.bf16.msra.mxu0 %v665
        %688 = vmatprep.subr.bf16.mxu0 0
        %689 = vmatpush1.bf16.msra.mxu0 %v666
        %690 = vmatprep.subr.bf16.mxu0 0
        %691 = vmatpush1.bf16.msra.mxu0 %v667
        %692 = vmatprep.subr.bf16.mxu0 0
        %693 = vmatpush1.bf16.msra.mxu0 0
        %694 = vmatprep.subr.bf16.mxu0 0
        %695 = vmatpush1.bf16.msra.mxu0 0
        %696 = vmatprep.subr.bf16.mxu0 0
        %697 = vmatpush1.bf16.msra.mxu0 0
        %698 = vmatprep.subr.bf16.mxu0 0
        %699 = vmatpush1.bf16.msra.mxu0 0
        %700 = vmatprep.subr.bf16.mxu0 0
        %701 = vmatpush1.bf16.msra.mxu0 0
        %702 = vmatprep.subr.bf16.mxu0 0
        %703 = vmatpush1.bf16.msra.mxu0 0
        %704 = vmatprep.subr.bf16.mxu0 0
        %705 = vmatpush1.bf16.msra.mxu0 0
        %706 = vmatprep.subr.bf16.mxu0 0
        %707 = vmatpush1.bf16.msra.mxu0 0
        %708 = vmatprep.mubr.bf16.mxu0 0
        %709 = vmatmul.mubr.bf16.gmra.mrb[0].mxu0 %v610
        %v710 = vpop.f32.mrb[0].mxu0
        %v711 = vadd.f32 %v627, %v710
        %v712 = vpop.f32.mrb[0].mxu0
        %v713 = vpop.f32.mrb[0].mxu0
        %v714 = vpop.f32.mrb[0].mxu0
        %715 = vdwg.mxu0
        %716 = vst [vmem:[%s259] sm:$0x1] %v711
        %s717 = sand.u32 %s164, 1
        %s718 = scalar_lea.sflag [#allocation3], %s717
        %s719 = sand.u32 %s164, 1
        %s720 = scalar_lea.vmem [#allocation2], %s719
        // Predicated region
        $region45: #{mask_gcn_forward.1} parent=43 // pred_check
          %p721 = pneg %p174
        $region46: #{mask_gcn_forward.1} parent=43 // pred_check_branch
          %723 = sbr.rel (%p721) target = $region48
        $region47: #{mask_gcn_forward.1} parent=43 // pred_region
          %s725 = ssub.s32 16, 16
          %726 = vsyncadd %s718, %s725
          %s727 = smul.addr %s20, 16
          %s728 = scalar_lea.hbm %s6, %s727
          %s730 = sshll.u32 %s720, 4
          %s731 = int_to_ptr.vmem [resolvable:$true] %s730
          %733 = dma.vmem_to_hbm [thread:$0]  %s731, 16, %s728, %s718
        $region48: #{mask_gcn_forward.1} parent=43 // pred_fallthru
          _
      $region44: #{mask_gcn_forward.1} parent=5 // pred_fallthru
        _
      %p734 = scmp.le.s32.totalorder 2, %s15
      // Predicated region
      $region49: #{mask_gcn_forward.1} parent=5 // pred_check
        %p735 = pneg %p734
      $region50: #{mask_gcn_forward.1} parent=5 // pred_check_branch
        %737 = sbr.rel (%p735) target = $region52
      $region51: #{mask_gcn_forward.1} parent=5 // pred_region
        %s738 = ssub.s32 %s15, 2
        // Predicated region
        $region53: #{mask_gcn_forward.1} parent=51 // pred_check
          %p739 = pneg %p180
        $region54: #{mask_gcn_forward.1} parent=51 // pred_check_branch
          %741 = sbr.rel (%p739) target = $region56
        $region55: #{mask_gcn_forward.1} parent=51 // pred_region
          %s742 = sand.u32 %s165, 1
          %s743 = scalar_lea.sflag [#allocation3], %s742
          %s744 = sand.u32 %s165, 1
          %s745 = scalar_lea.vmem [#allocation2], %s744
          %746 = dma.done %s743, 16
        $region56: #{mask_gcn_forward.1} parent=51 // pred_fallthru
          _
      $region52: #{mask_gcn_forward.1} parent=5 // pred_fallthru
        _
    $region6: #{mask_gcn_forward.1} parent=1 // loop_footer
      %s19 = sadd.s32 1, %s15
    $region7: #{mask_gcn_forward.1} parent=1 // loop_footer_branch
      %14 = sbr.rel target = $region3
    $region8: #{mask_gcn_forward.1} parent=1 // loop_exit
      _
    %747 = vsyncpa [#allocation3], 1
    %s748 = scalar_lea.sflag [#allocation3], 1
    %749 = vsyncpa %s748, 1

</llo_original>
